<compile_context>
chip_gen: v7x
topology: tpu7x:2x2x1
jax: 0.10.0
libtpu: 0.0.40
codegen_flags: <defaults>
</compile_context>

<pallas_src>
import jax
import jax.numpy as jnp
from jax import lax
from jax.experimental import pallas as pl
from jax.experimental.pallas import tpu as pltpu


def _build_conv_matrix(w_conv, H, W):
    """Fold the 3x3 'same' conv (incl. zero padding) into a dense (HW, C_out*HW) matrix.

    A_T[p_in, c*HW + p_out] = w_conv[c, 0, ky, kx] when input pixel p_in is the
    (ky, kx) tap of output pixel p_out, else 0.  Built with elementwise 0/1 masks
    only (no matmul), so it is exact in f32.
    """
    C_out = w_conv.shape[0]
    HW = H * W
    w = w_conv.reshape(C_out, 3, 3).astype(jnp.float32)
    ys = jnp.arange(H)[:, None]                     # (H, 1)
    xs = jnp.arange(W)[None, :]                     # (1, W)
    p_range = jnp.arange(HW)[None, :]               # (1, HW)
    A = jnp.zeros((C_out, HW, HW), jnp.float32)     # [c, p_out, p_in]
    for ky in range(3):
        for kx in range(3):
            yin = ys + (ky - 1)
            xin = xs + (kx - 1)
            valid = (yin >= 0) & (yin < H) & (xin >= 0) & (xin < W)          # (H, W)
            p_in = jnp.clip(yin, 0, H - 1) * W + jnp.clip(xin, 0, W - 1)     # (H, W)
            scat = ((p_in.reshape(HW, 1) == p_range) & valid.reshape(HW, 1))
            scat = scat.astype(jnp.float32)                                  # (p_out, p_in)
            A = A + w[:, ky, kx][:, None, None] * scat[None]
    return A.transpose(2, 0, 1).reshape(HW, C_out * HW)                      # (p_in, c*HW+p_out)


def _patch_grouping_kernel(x_ref, a_ref, bc_ref, wf_ref, bf_ref, o_ref):
    """One batch tile.

    x_ref : (TB, HW)      raw pixels, natural row-major layout
    a_ref : (HW, CO*HW)   conv-as-matmul matrix (zero padding baked in)
    bc_ref: (1, CO*HW)    conv bias broadcast over output pixels
    wf_ref: (CO*HW, G)    pooling(1/HW) + fc weight, fused
    bf_ref: (1, G)        fc bias
    o_ref : (TB, G)       logits for this batch tile
    """
    conv = jnp.dot(x_ref[...], a_ref[...],
                   preferred_element_type=jnp.float32,
                   precision=jax.lax.Precision.HIGHEST)            # (TB, CO*HW)  MXU
    conv = jnp.maximum(conv + bc_ref[...], 0.0)                    # bias + ReLU  VPU (lane-dense)
    out = jnp.dot(conv, wf_ref[...],
                  preferred_element_type=jnp.float32,
                  precision=jax.lax.Precision.HIGHEST) + bf_ref[...]   # (TB, G)   MXU
    o_ref[...] = out.astype(o_ref.dtype)


def patch_grouping_net(patches, w_conv, b_conv, w_fc, b_fc, *, tb_max=2048):
    """patches: (B, 1, H, W) float32.  Returns (B, num_groups) float32."""
    B, C, H, W = patches.shape
    assert C == 1, "PatchGroupingNet expects single-channel patches"
    G = w_fc.shape[0]
    CO = w_conv.shape[0]
    HW = H * W

    # Natural row-major pixel layout (pure reshape, no host transpose).
    x = patches.reshape(B, HW).astype(jnp.float32)

    # Batch tiling: one sublane-aligned tile for small B, large tiles (<= tb_max rows,
    # >=2 grid steps for big B so v7x's two TensorCores both get work) otherwise.
    B8 = ((B + 7) // 8) * 8
    TB = B8 if B8 <= tb_max else tb_max
    B_pad = pl.cdiv(B, TB) * TB
    if B_pad != B:
        x = jnp.pad(x, ((0, B_pad - B), (0, 0)))
    num_tiles = B_pad // TB

    # Host-folded parameters (all tiny, VMEM-resident via constant index_maps).
    a_mat = _build_conv_matrix(w_conv, H, W)                                  # (HW, CO*HW)
    bc_row = jnp.repeat(b_conv.astype(jnp.float32), HW)[None, :]              # (1, CO*HW)
    wf2 = jnp.repeat(w_fc.T.astype(jnp.float32) / float(HW), HW, axis=0)      # (CO*HW, G)
    bf_row = b_fc.astype(jnp.float32)[None, :]                                # (1, G)

    flops = 2 * B_pad * HW * CO * HW + 2 * B_pad * CO * HW * G
    bytes_accessed = 4 * (B_pad * HW + B_pad * G + HW * CO * HW
                          + CO * HW + CO * HW * G + G)

    out = pl.pallas_call(
        _patch_grouping_kernel,
        out_shape=jax.ShapeDtypeStruct((B_pad, G), jnp.float32),
        grid=(num_tiles,),
        in_specs=[
            pl.BlockSpec((TB, HW), lambda i: (i, 0)),        # pixel tile (double-buffered)
            pl.BlockSpec((HW, CO * HW), lambda i: (0, 0)),   # conv matrix
            pl.BlockSpec((1, CO * HW), lambda i: (0, 0)),    # conv bias row
            pl.BlockSpec((CO * HW, G), lambda i: (0, 0)),    # fused pool+fc weight
            pl.BlockSpec((1, G), lambda i: (0, 0)),          # fc bias row
        ],
        out_specs=pl.BlockSpec((TB, G), lambda i: (i, 0)),
        compiler_params=pltpu.CompilerParams(dimension_semantics=("parallel",)),
        cost_estimate=pl.CostEstimate(flops=flops, transcendentals=0,
                                      bytes_accessed=bytes_accessed),
    )(x, a_mat, bc_row, wf2, bf_row)

    return out[:B]                                           # (B, G)


def reference(patches, w_conv, b_conv, w_fc, b_fc):
    """Pure-JAX reference mirroring the PyTorch module."""
    y = lax.conv_general_dilated(
        patches.astype(jnp.float32), w_conv.astype(jnp.float32),
        window_strides=(1, 1), padding=((1, 1), (1, 1)),
        dimension_numbers=("NCHW", "OIHW", "NCHW"),
        precision=lax.Precision.HIGHEST)
    y = jnp.maximum(y + b_conv[None, :, None, None], 0.0)
    y = jnp.mean(y, axis=(2, 3))                             # AdaptiveAvgPool2d((1,1)) + Flatten
    return jnp.dot(y, w_fc.T, precision=lax.Precision.HIGHEST) + b_fc


if __name__ == "__main__":
    key = jax.random.PRNGKey(0)
    k_x, k_wc, k_bc, k_wf, k_bf = jax.random.split(key, 5)

    B, patch_size, num_groups = 8, 4, 8
    patches = jax.random.normal(k_x, (B, 1, patch_size, patch_size), dtype=jnp.float32)

    # deterministic synthetic parameters (shapes from the PyTorch __init__)
    w_conv = 0.1 * jax.random.normal(k_wc, (16, 1, 3, 3), dtype=jnp.float32)
    b_conv = 0.1 * jax.random.normal(k_bc, (16,), dtype=jnp.float32)
    w_fc = 0.1 * jax.random.normal(k_wf, (num_groups, 16), dtype=jnp.float32)
    b_fc = 0.1 * jax.random.normal(k_bf, (num_groups,), dtype=jnp.float32)

    out = jax.block_until_ready(patch_grouping_net(patches, w_conv, b_conv, w_fc, b_fc))
    ref = jax.block_until_ready(reference(patches, w_conv, b_conv, w_fc, b_fc))
    assert out.shape == (B, num_groups)
    assert jnp.allclose(out, ref, atol=1e-4, rtol=1e-4), (out, ref)
    print("KERNEL_OK")
</pallas_src>

<mosaic_0001>
module attributes {stable_mosaic.version = 11 : i64} {
  func.func @_patch_grouping_kernel(%arg0: i32, %arg1: memref<8x16xf32, #tpu.memory_space<vmem>>, %arg2: memref<16x256xf32, #tpu.memory_space<vmem>>, %arg3: memref<1x256xf32, #tpu.memory_space<vmem>>, %arg4: memref<256x8xf32, #tpu.memory_space<vmem>>, %arg5: memref<1x8xf32, #tpu.memory_space<vmem>>, %arg6: memref<8x8xf32, #tpu.memory_space<vmem>>) attributes {dimension_semantics = [#tpu.dimension_semantics<parallel>], iteration_bounds = array<i64: 1>, scalar_prefetch = 0 : i64, scratch_operands = 0 : i64, tpu.core_type = #tpu.core_type<tc>, window_params = [{transform_indices = @transform_0, window_bounds = array<i64: 8, 16>}, {pipeline_mode = #tpu.pipeline_mode<synchronous>, transform_indices = @transform_1, window_bounds = array<i64: 16, 256>}, {pipeline_mode = #tpu.pipeline_mode<synchronous>, transform_indices = @transform_2, window_bounds = array<i64: 1, 256>}, {pipeline_mode = #tpu.pipeline_mode<synchronous>, transform_indices = @transform_3, window_bounds = array<i64: 256, 8>}, {pipeline_mode = #tpu.pipeline_mode<synchronous>, transform_indices = @transform_4, window_bounds = array<i64: 1, 8>}, {transform_indices = @transform_5, window_bounds = array<i64: 8, 8>}]} {
    %c0 = arith.constant 0 : index
    %c0_0 = arith.constant 0 : index
    %0 = vector.load %arg1[%c0, %c0_0] : memref<8x16xf32, #tpu.memory_space<vmem>>, vector<8x16xf32>
    %c0_1 = arith.constant 0 : index
    %c0_2 = arith.constant 0 : index
    %1 = vector.load %arg2[%c0_1, %c0_2] : memref<16x256xf32, #tpu.memory_space<vmem>>, vector<16x256xf32>
    %cst = arith.constant dense<0.000000e+00> : vector<8x256xf32>
    %2 = tpu.matmul %0, %1, %cst {dimension_numbers = #tpu.dot_dimension_numbers<[1], [0], [0], [1], [0, 0, 1, 1], [], []>, precision = #tpu.contract_precision<fp32>} : vector<8x16xf32>, vector<16x256xf32>, vector<8x256xf32> -> vector<8x256xf32>
    %c0_3 = arith.constant 0 : index
    %c0_4 = arith.constant 0 : index
    %3 = vector.load %arg3[%c0_3, %c0_4] : memref<1x256xf32, #tpu.memory_space<vmem>>, vector<1x256xf32>
    %4 = vector.broadcast %3 : vector<1x256xf32> to vector<8x256xf32>
    %5 = arith.addf %2, %4 : vector<8x256xf32>
    %cst_5 = arith.constant 0.000000e+00 : f32
    %6 = vector.broadcast %cst_5 : f32 to vector<8x256xf32>
    %7 = arith.maximumf %5, %6 : vector<8x256xf32>
    %c0_6 = arith.constant 0 : index
    %c0_7 = arith.constant 0 : index
    %8 = vector.load %arg4[%c0_6, %c0_7] : memref<256x8xf32, #tpu.memory_space<vmem>>, vector<256x8xf32>
    %cst_8 = arith.constant dense<0.000000e+00> : vector<8x8xf32>
    %9 = tpu.matmul %7, %8, %cst_8 {dimension_numbers = #tpu.dot_dimension_numbers<[1], [0], [0], [1], [0, 0, 1, 1], [], []>, precision = #tpu.contract_precision<fp32>} : vector<8x256xf32>, vector<256x8xf32>, vector<8x8xf32> -> vector<8x8xf32>
    %c0_9 = arith.constant 0 : index
    %c0_10 = arith.constant 0 : index
    %10 = vector.load %arg5[%c0_9, %c0_10] : memref<1x8xf32, #tpu.memory_space<vmem>>, vector<1x8xf32>
    %11 = vector.broadcast %10 : vector<1x8xf32> to vector<8x8xf32>
    %12 = arith.addf %9, %11 : vector<8x8xf32>
    %c0_11 = arith.constant 0 : index
    %c0_12 = arith.constant 0 : index
    %13 = vector.load %arg6[%c0_11, %c0_12] : memref<8x8xf32, #tpu.memory_space<vmem>>, vector<8x8xf32>
    tpu.vector_store %arg6[%c0_11, %c0_12], %12 {strides = array<i32>} : memref<8x8xf32, #tpu.memory_space<vmem>>, vector<8x8xf32>,
    return
  }
  func.func @transform_0(%arg0: i32) -> (i32, i32) {
    %c0_i32 = arith.constant 0 : i32
    %c0_i32_0 = arith.constant 0 : i32
    return %arg0, %c0_i32 : i32, i32
  }
  func.func @transform_1(%arg0: i32) -> (i32, i32) {
    %c0_i32 = arith.constant 0 : i32
    %c0_i32_0 = arith.constant 0 : i32
    %c0_i32_1 = arith.constant 0 : i32
    return %c0_i32, %c0_i32_0 : i32, i32
  }
  func.func @transform_2(%arg0: i32) -> (i32, i32) {
    %c0_i32 = arith.constant 0 : i32
    %c0_i32_0 = arith.constant 0 : i32
    %c0_i32_1 = arith.constant 0 : i32
    return %c0_i32, %c0_i32_0 : i32, i32
  }
  func.func @transform_3(%arg0: i32) -> (i32, i32) {
    %c0_i32 = arith.constant 0 : i32
    %c0_i32_0 = arith.constant 0 : i32
    %c0_i32_1 = arith.constant 0 : i32
    return %c0_i32, %c0_i32_0 : i32, i32
  }
  func.func @transform_4(%arg0: i32) -> (i32, i32) {
    %c0_i32 = arith.constant 0 : i32
    %c0_i32_0 = arith.constant 0 : i32
    %c0_i32_1 = arith.constant 0 : i32
    return %c0_i32, %c0_i32_0 : i32, i32
  }
  func.func @transform_5(%arg0: i32) -> (i32, i32) {
    %c0_i32 = arith.constant 0 : i32
    %c0_i32_0 = arith.constant 0 : i32
    return %arg0, %c0_i32 : i32, i32
  }
}

</mosaic_0001>

<llo_original>
// kernel: tpu_custom_call.1
$region0: #{tpu_custom_call.1}
  #allocation0 [shape = 'u32[]', space=smem, size = 0x4, offset = 0x4, fixed_abs, tag = 'smem constant byte address 0x4 - core index']
  #allocation1 [shape = 'u32[144,128]{1,0:T(1,128)}', space=vmem, size = 0x12000, scoped, tag = 'internal scratch']
  %s0 = inlined_call_operand.vmem [shape: f32[8,16], index: 0, kind: input, shape index: {}]
  %s1 = inlined_call_operand.vmem [shape: f32[16,256], index: 1, kind: input, shape index: {}]
  %s2 = inlined_call_operand.vmem [shape: f32[1,256], index: 2, kind: input, shape index: {}]
  %s3 = inlined_call_operand.vmem [shape: f32[256,8], index: 3, kind: input, shape index: {}]
  %s4 = inlined_call_operand.vmem [shape: f32[1,8], index: 4, kind: input, shape index: {}]
  %s5 = inlined_call_operand.hbm [shape: f32[8,8], index: 5, kind: output, shape index: {}]
  %s6 = sld [smem:[#allocation0]]
  $region30: #{tpu_custom_call.1} parent=0
    _
  %s8 = ssub.s32 1, %s6
  %s9 = scalar_select 0, %s8, %s6
  $region1: #{tpu_custom_call.1} parent=0
    #allocation2 [shape = 'u8[4096]{0}', space=vmem, size = 0x1000, scoped, tag = 'output window, operand 0, single buffered']
    #allocation3 [shape = 's32[1]{0}', space=sflag, size = 0x4, scoped, tag = 'scoped memory for tpu_custom_call.1']
    %10 = vsyncpa [#allocation3], 0
    // Predicated region
    $region2: #{tpu_custom_call.1} parent=1 // pred_check
      _
    $region3: #{tpu_custom_call.1} parent=1 // pred_check_branch
      %12 = sbr.rel (0) target = $region5
    $region4: #{tpu_custom_call.1} parent=1 // pred_region
      _
    $region5: #{tpu_custom_call.1} parent=1 // pred_fallthru
      _
    // Predicated region
    $region6: #{tpu_custom_call.1} parent=1 // pred_check
      _
    $region7: #{tpu_custom_call.1} parent=1 // pred_check_branch
      %14 = sbr.rel (0) target = $region9
    $region8: #{tpu_custom_call.1} parent=1 // pred_region
      _
    $region9: #{tpu_custom_call.1} parent=1 // pred_fallthru
      _
    // Predicated region
    $region10: #{tpu_custom_call.1} parent=1 // pred_check
      _
    $region11: #{tpu_custom_call.1} parent=1 // pred_check_branch
      %16 = sbr.rel (0) target = $region13
    $region12: #{tpu_custom_call.1} parent=1 // pred_region
      _
    $region13: #{tpu_custom_call.1} parent=1 // pred_fallthru
      _
    // Predicated region
    $region14: #{tpu_custom_call.1} parent=1 // pred_check
      _
    $region15: #{tpu_custom_call.1} parent=1 // pred_check_branch
      %18 = sbr.rel (0) target = $region17
    $region16: #{tpu_custom_call.1} parent=1 // pred_region
      _
    $region17: #{tpu_custom_call.1} parent=1 // pred_fallthru
      _
    // Predicated region
    $region18: #{tpu_custom_call.1} parent=1 // pred_check
      _
    $region19: #{tpu_custom_call.1} parent=1 // pred_check_branch
      %20 = sbr.rel (0) target = $region21
    $region20: #{tpu_custom_call.1} parent=1 // pred_region
      _
    $region21: #{tpu_custom_call.1} parent=1 // pred_fallthru
      _
    %v21 = vld [vmem:[%s0] sm:$0xff]
    %v22 = vld [vmem:[%s1] sm:$0xff]
    %v23 = vld [vmem:[%s1 + $0x8] sm:$0xff]
    %v24 = vld [vmem:[%s1 + $0x10] sm:$0xff]
    %v25 = vld [vmem:[%s1 + $0x18] sm:$0xff]
    %v26 = vld [vmem:[%s2] sm:$0x3]
    %v28 = vlaneseq
    %v29 = vshrl.u32 %v28, 7
    %v30 = vsub.s32 0, %v29
    %v31 = vrot.slane %v26, %v30
    %v32 = vlaneseq
    %v33 = vshrl.u32 %v32, 7
    %v34 = vsub.s32 1, %v33
    %v35 = vrot.slane %v26, %v34
    %vm38 = vcmask 130048
    %v40 = vsel %vm38, %v21, 0
    %v42 = vand.u32 %v23, 4294901760
    %43 = vmatprep.subr.mxu0 %v42
    %v44 = vand.u32 %v22, 4294901760
    %45 = vmatpush1.msra.mxu0 %v44
    %v46 = vand.u32 %v25, 4294901760
    %47 = vmatprep.subr.mxu0 %v46
    %v48 = vand.u32 %v24, 4294901760
    %49 = vmatpush1.msra.mxu0 %v48
    %50 = vmatprep.subr.mxu0 0.0
    %51 = vmatpush1.msra.mxu0 0.0
    %52 = vmatprep.subr.mxu0 0.0
    %53 = vmatpush1.msra.mxu0 0.0
    %54 = vmatprep.subr.mxu0 0.0
    %55 = vmatpush1.msra.mxu0 0.0
    %56 = vmatprep.subr.mxu0 0.0
    %57 = vmatpush1.msra.mxu0 0.0
    %58 = vmatprep.subr.mxu0 0.0
    %59 = vmatpush1.msra.mxu0 0.0
    %60 = vmatprep.subr.mxu0 0.0
    %61 = vmatpush1.msra.mxu0 0.0
    %62 = vmatprep.subr.mxu0 0.0
    %63 = vmatpush1.msra.mxu0 0.0
    %64 = vmatprep.subr.mxu0 0.0
    %65 = vmatpush1.msra.mxu0 0.0
    %66 = vmatprep.subr.mxu0 0.0
    %67 = vmatpush1.msra.mxu0 0.0
    %68 = vmatprep.subr.mxu0 0.0
    %69 = vmatpush1.msra.mxu0 0.0
    %70 = vmatprep.subr.mxu0 0.0
    %71 = vmatpush1.msra.mxu0 0.0
    %72 = vmatprep.subr.mxu0 0.0
    %73 = vmatpush1.msra.mxu0 0.0
    %74 = vmatprep.subr.mxu0 0.0
    %75 = vmatpush1.msra.mxu0 0.0
    %76 = vmatprep.subr.mxu0 0.0
    %77 = vmatpush1.msra.mxu0 0.0
    %78 = vmatprep.subr.mxu0 0.0
    %79 = vmatpush1.msra.mxu0 0.0
    %80 = vmatprep.subr.mxu0 0.0
    %81 = vmatpush1.msra.mxu0 0.0
    %82 = vmatprep.subr.mxu0 0.0
    %83 = vmatpush1.msra.mxu0 0.0
    %84 = vmatprep.subr.mxu0 0.0
    %85 = vmatpush1.msra.mxu0 0.0
    %86 = vmatprep.subr.mxu0 0.0
    %87 = vmatpush1.msra.mxu0 0.0
    %88 = vmatprep.subr.mxu0 0.0
    %89 = vmatpush1.msra.mxu0 0.0
    %90 = vmatprep.subr.mxu0 0.0
    %91 = vmatpush1.msra.mxu0 0.0
    %92 = vmatprep.subr.mxu0 0.0
    %93 = vmatpush1.msra.mxu0 0.0
    %94 = vmatprep.subr.mxu0 0.0
    %95 = vmatpush1.msra.mxu0 0.0
    %96 = vmatprep.subr.mxu0 0.0
    %97 = vmatpush1.msra.mxu0 0.0
    %98 = vmatprep.subr.mxu0 0.0
    %99 = vmatpush1.msra.mxu0 0.0
    %100 = vmatprep.subr.mxu0 0.0
    %101 = vmatpush1.msra.mxu0 0.0
    %102 = vmatprep.subr.mxu0 0.0
    %103 = vmatpush1.msra.mxu0 0.0
    %104 = vmatprep.subr.mxu0 0.0
    %105 = vmatpush1.msra.mxu0 0.0
    %106 = vmatprep.subr.mxu0 0.0
    %107 = vmatpush1.msra.mxu0 0.0
    %108 = vmatprep.subr.mxu0 0.0
    %109 = vmatpush1.msra.mxu0 0.0
    %110 = vmatprep.mubr.f32.mxu0 0.0
    %v111 = vand.u32 %v40, 4294901760
    %v112 = vsub.f32 %v40, %v111
    %v113 = vand.u32 %v112, 4294901760
    %v114 = vsub.f32 %v112, %v113
    %v115 = vand.u32 %v114, 4294901760
    %116 = vmatmul.mubr.f32.gmra.mrb[0].mxu0 %v115
    %v117 = vpop.f32.mrb[0].mxu0
    %v118 = vadd.f32 %v31, %v117
    %v119 = vpop.f32.mrb[0].mxu0
    %v120 = vadd.f32 %v35, %v119
    %121 = vdwg.mxu0
    %v122 = vand.u32 %v23, 4294901760
    %v123 = vsub.f32 %v23, %v122
    %v124 = vand.u32 %v123, 4294901760
    %v125 = vsub.f32 %v123, %v124
    %v126 = vand.u32 %v125, 4294901760
    %127 = vmatprep.subr.mxu0 %v126
    %v128 = vand.u32 %v22, 4294901760
    %v129 = vsub.f32 %v22, %v128
    %v130 = vand.u32 %v129, 4294901760
    %v131 = vsub.f32 %v129, %v130
    %v132 = vand.u32 %v131, 4294901760
    %133 = vmatpush1.msra.mxu0 %v132
    %v134 = vand.u32 %v25, 4294901760
    %v135 = vsub.f32 %v25, %v134
    %v136 = vand.u32 %v135, 4294901760
    %v137 = vsub.f32 %v135, %v136
    %v138 = vand.u32 %v137, 4294901760
    %139 = vmatprep.subr.mxu0 %v138
    %v140 = vand.u32 %v24, 4294901760
    %v141 = vsub.f32 %v24, %v140
    %v142 = vand.u32 %v141, 4294901760
    %v143 = vsub.f32 %v141, %v142
    %v144 = vand.u32 %v143, 4294901760
    %145 = vmatpush1.msra.mxu0 %v144
    %146 = vmatprep.subr.mxu0 0.0
    %147 = vmatpush1.msra.mxu0 0.0
    %148 = vmatprep.subr.mxu0 0.0
    %149 = vmatpush1.msra.mxu0 0.0
    %150 = vmatprep.subr.mxu0 0.0
    %151 = vmatpush1.msra.mxu0 0.0
    %152 = vmatprep.subr.mxu0 0.0
    %153 = vmatpush1.msra.mxu0 0.0
    %154 = vmatprep.subr.mxu0 0.0
    %155 = vmatpush1.msra.mxu0 0.0
    %156 = vmatprep.subr.mxu0 0.0
    %157 = vmatpush1.msra.mxu0 0.0
    %158 = vmatprep.subr.mxu0 0.0
    %159 = vmatpush1.msra.mxu0 0.0
    %160 = vmatprep.subr.mxu0 0.0
    %161 = vmatpush1.msra.mxu0 0.0
    %162 = vmatprep.subr.mxu0 0.0
    %163 = vmatpush1.msra.mxu0 0.0
    %164 = vmatprep.subr.mxu0 0.0
    %165 = vmatpush1.msra.mxu0 0.0
    %166 = vmatprep.subr.mxu0 0.0
    %167 = vmatpush1.msra.mxu0 0.0
    %168 = vmatprep.subr.mxu0 0.0
    %169 = vmatpush1.msra.mxu0 0.0
    %170 = vmatprep.subr.mxu0 0.0
    %171 = vmatpush1.msra.mxu0 0.0
    %172 = vmatprep.subr.mxu0 0.0
    %173 = vmatpush1.msra.mxu0 0.0
    %174 = vmatprep.subr.mxu0 0.0
    %175 = vmatpush1.msra.mxu0 0.0
    %176 = vmatprep.subr.mxu0 0.0
    %177 = vmatpush1.msra.mxu0 0.0
    %178 = vmatprep.subr.mxu0 0.0
    %179 = vmatpush1.msra.mxu0 0.0
    %180 = vmatprep.subr.mxu0 0.0
    %181 = vmatpush1.msra.mxu0 0.0
    %182 = vmatprep.subr.mxu0 0.0
    %183 = vmatpush1.msra.mxu0 0.0
    %184 = vmatprep.subr.mxu0 0.0
    %185 = vmatpush1.msra.mxu0 0.0
    %186 = vmatprep.subr.mxu0 0.0
    %187 = vmatpush1.msra.mxu0 0.0
    %188 = vmatprep.subr.mxu0 0.0
    %189 = vmatpush1.msra.mxu0 0.0
    %190 = vmatprep.subr.mxu0 0.0
    %191 = vmatpush1.msra.mxu0 0.0
    %192 = vmatprep.subr.mxu0 0.0
    %193 = vmatpush1.msra.mxu0 0.0
    %194 = vmatprep.subr.mxu0 0.0
    %195 = vmatpush1.msra.mxu0 0.0
    %196 = vmatprep.subr.mxu0 0.0
    %197 = vmatpush1.msra.mxu0 0.0
    %198 = vmatprep.subr.mxu0 0.0
    %199 = vmatpush1.msra.mxu0 0.0
    %200 = vmatprep.subr.mxu0 0.0
    %201 = vmatpush1.msra.mxu0 0.0
    %202 = vmatprep.subr.mxu0 0.0
    %203 = vmatpush1.msra.mxu0 0.0
    %204 = vmatprep.subr.mxu0 0.0
    %205 = vmatpush1.msra.mxu0 0.0
    %206 = vmatprep.mubr.f32.mxu0 0.0
    %v207 = vand.u32 %v40, 4294901760
    %208 = vmatmul.mubr.f32.gmra.mrb[0].mxu0 %v207
    %v209 = vpop.f32.mrb[0].mxu0
    %v210 = vadd.f32 %v118, %v209
    %v211 = vpop.f32.mrb[0].mxu0
    %v212 = vadd.f32 %v120, %v211
    %213 = vdwg.mxu0
    %v214 = vand.u32 %v23, 4294901760
    %v215 = vsub.f32 %v23, %v214
    %216 = vmatprep.subr.mxu0 %v215
    %v217 = vand.u32 %v22, 4294901760
    %v218 = vsub.f32 %v22, %v217
    %219 = vmatpush1.msra.mxu0 %v218
    %v220 = vand.u32 %v25, 4294901760
    %v221 = vsub.f32 %v25, %v220
    %222 = vmatprep.subr.mxu0 %v221
    %v223 = vand.u32 %v24, 4294901760
    %v224 = vsub.f32 %v24, %v223
    %225 = vmatpush1.msra.mxu0 %v224
    %226 = vmatprep.subr.mxu0 0.0
    %227 = vmatpush1.msra.mxu0 0.0
    %228 = vmatprep.subr.mxu0 0.0
    %229 = vmatpush1.msra.mxu0 0.0
    %230 = vmatprep.subr.mxu0 0.0
    %231 = vmatpush1.msra.mxu0 0.0
    %232 = vmatprep.subr.mxu0 0.0
    %233 = vmatpush1.msra.mxu0 0.0
    %234 = vmatprep.subr.mxu0 0.0
    %235 = vmatpush1.msra.mxu0 0.0
    %236 = vmatprep.subr.mxu0 0.0
    %237 = vmatpush1.msra.mxu0 0.0
    %238 = vmatprep.subr.mxu0 0.0
    %239 = vmatpush1.msra.mxu0 0.0
    %240 = vmatprep.subr.mxu0 0.0
    %241 = vmatpush1.msra.mxu0 0.0
    %242 = vmatprep.subr.mxu0 0.0
    %243 = vmatpush1.msra.mxu0 0.0
    %244 = vmatprep.subr.mxu0 0.0
    %245 = vmatpush1.msra.mxu0 0.0
    %246 = vmatprep.subr.mxu0 0.0
    %247 = vmatpush1.msra.mxu0 0.0
    %248 = vmatprep.subr.mxu0 0.0
    %249 = vmatpush1.msra.mxu0 0.0
    %250 = vmatprep.subr.mxu0 0.0
    %251 = vmatpush1.msra.mxu0 0.0
    %252 = vmatprep.subr.mxu0 0.0
    %253 = vmatpush1.msra.mxu0 0.0
    %254 = vmatprep.subr.mxu0 0.0
    %255 = vmatpush1.msra.mxu0 0.0
    %256 = vmatprep.subr.mxu0 0.0
    %257 = vmatpush1.msra.mxu0 0.0
    %258 = vmatprep.subr.mxu0 0.0
    %259 = vmatpush1.msra.mxu0 0.0
    %260 = vmatprep.subr.mxu0 0.0
    %261 = vmatpush1.msra.mxu0 0.0
    %262 = vmatprep.subr.mxu0 0.0
    %263 = vmatpush1.msra.mxu0 0.0
    %264 = vmatprep.subr.mxu0 0.0
    %265 = vmatpush1.msra.mxu0 0.0
    %266 = vmatprep.subr.mxu0 0.0
    %267 = vmatpush1.msra.mxu0 0.0
    %268 = vmatprep.subr.mxu0 0.0
    %269 = vmatpush1.msra.mxu0 0.0
    %270 = vmatprep.subr.mxu0 0.0
    %271 = vmatpush1.msra.mxu0 0.0
    %272 = vmatprep.subr.mxu0 0.0
    %273 = vmatpush1.msra.mxu0 0.0
    %274 = vmatprep.subr.mxu0 0.0
    %275 = vmatpush1.msra.mxu0 0.0
    %276 = vmatprep.subr.mxu0 0.0
    %277 = vmatpush1.msra.mxu0 0.0
    %278 = vmatprep.subr.mxu0 0.0
    %279 = vmatpush1.msra.mxu0 0.0
    %280 = vmatprep.subr.mxu0 0.0
    %281 = vmatpush1.msra.mxu0 0.0
    %282 = vmatprep.subr.mxu0 0.0
    %283 = vmatpush1.msra.mxu0 0.0
    %284 = vmatprep.subr.mxu0 0.0
    %285 = vmatpush1.msra.mxu0 0.0
    %286 = vmatprep.mubr.f32.mxu0 0.0
    %v287 = vand.u32 %v40, 4294901760
    %v288 = vsub.f32 %v40, %v287
    %289 = vmatmul.mubr.f32.gmra.mrb[0].mxu0 %v288
    %v290 = vpop.f32.mrb[0].mxu0
    %v291 = vadd.f32 %v210, %v290
    %v292 = vpop.f32.mrb[0].mxu0
    %v293 = vadd.f32 %v212, %v292
    %294 = vdwg.mxu0
    %v295 = vand.u32 %v23, 4294901760
    %296 = vmatprep.subr.mxu0 %v295
    %v297 = vand.u32 %v22, 4294901760
    %298 = vmatpush1.msra.mxu0 %v297
    %v299 = vand.u32 %v25, 4294901760
    %300 = vmatprep.subr.mxu0 %v299
    %v301 = vand.u32 %v24, 4294901760
    %302 = vmatpush1.msra.mxu0 %v301
    %303 = vmatprep.subr.mxu0 0.0
    %304 = vmatpush1.msra.mxu0 0.0
    %305 = vmatprep.subr.mxu0 0.0
    %306 = vmatpush1.msra.mxu0 0.0
    %307 = vmatprep.subr.mxu0 0.0
    %308 = vmatpush1.msra.mxu0 0.0
    %309 = vmatprep.subr.mxu0 0.0
    %310 = vmatpush1.msra.mxu0 0.0
    %311 = vmatprep.subr.mxu0 0.0
    %312 = vmatpush1.msra.mxu0 0.0
    %313 = vmatprep.subr.mxu0 0.0
    %314 = vmatpush1.msra.mxu0 0.0
    %315 = vmatprep.subr.mxu0 0.0
    %316 = vmatpush1.msra.mxu0 0.0
    %317 = vmatprep.subr.mxu0 0.0
    %318 = vmatpush1.msra.mxu0 0.0
    %319 = vmatprep.subr.mxu0 0.0
    %320 = vmatpush1.msra.mxu0 0.0
    %321 = vmatprep.subr.mxu0 0.0
    %322 = vmatpush1.msra.mxu0 0.0
    %323 = vmatprep.subr.mxu0 0.0
    %324 = vmatpush1.msra.mxu0 0.0
    %325 = vmatprep.subr.mxu0 0.0
    %326 = vmatpush1.msra.mxu0 0.0
    %327 = vmatprep.subr.mxu0 0.0
    %328 = vmatpush1.msra.mxu0 0.0
    %329 = vmatprep.subr.mxu0 0.0
    %330 = vmatpush1.msra.mxu0 0.0
    %331 = vmatprep.subr.mxu0 0.0
    %332 = vmatpush1.msra.mxu0 0.0
    %333 = vmatprep.subr.mxu0 0.0
    %334 = vmatpush1.msra.mxu0 0.0
    %335 = vmatprep.subr.mxu0 0.0
    %336 = vmatpush1.msra.mxu0 0.0
    %337 = vmatprep.subr.mxu0 0.0
    %338 = vmatpush1.msra.mxu0 0.0
    %339 = vmatprep.subr.mxu0 0.0
    %340 = vmatpush1.msra.mxu0 0.0
    %341 = vmatprep.subr.mxu0 0.0
    %342 = vmatpush1.msra.mxu0 0.0
    %343 = vmatprep.subr.mxu0 0.0
    %344 = vmatpush1.msra.mxu0 0.0
    %345 = vmatprep.subr.mxu0 0.0
    %346 = vmatpush1.msra.mxu0 0.0
    %347 = vmatprep.subr.mxu0 0.0
    %348 = vmatpush1.msra.mxu0 0.0
    %349 = vmatprep.subr.mxu0 0.0
    %350 = vmatpush1.msra.mxu0 0.0
    %351 = vmatprep.subr.mxu0 0.0
    %352 = vmatpush1.msra.mxu0 0.0
    %353 = vmatprep.subr.mxu0 0.0
    %354 = vmatpush1.msra.mxu0 0.0
    %355 = vmatprep.subr.mxu0 0.0
    %356 = vmatpush1.msra.mxu0 0.0
    %357 = vmatprep.subr.mxu0 0.0
    %358 = vmatpush1.msra.mxu0 0.0
    %359 = vmatprep.subr.mxu0 0.0
    %360 = vmatpush1.msra.mxu0 0.0
    %361 = vmatprep.subr.mxu0 0.0
    %362 = vmatpush1.msra.mxu0 0.0
    %363 = vmatprep.mubr.f32.mxu0 0.0
    %v364 = vand.u32 %v40, 4294901760
    %v365 = vsub.f32 %v40, %v364
    %v366 = vand.u32 %v365, 4294901760
    %367 = vmatmul.mubr.f32.gmra.mrb[0].mxu0 %v366
    %v368 = vpop.f32.mrb[0].mxu0
    %v369 = vadd.f32 %v291, %v368
    %v370 = vpop.f32.mrb[0].mxu0
    %v371 = vadd.f32 %v293, %v370
    %372 = vdwg.mxu0
    %v373 = vand.u32 %v23, 4294901760
    %v374 = vsub.f32 %v23, %v373
    %v375 = vand.u32 %v374, 4294901760
    %376 = vmatprep.subr.mxu0 %v375
    %v377 = vand.u32 %v22, 4294901760
    %v378 = vsub.f32 %v22, %v377
    %v379 = vand.u32 %v378, 4294901760
    %380 = vmatpush1.msra.mxu0 %v379
    %v381 = vand.u32 %v25, 4294901760
    %v382 = vsub.f32 %v25, %v381
    %v383 = vand.u32 %v382, 4294901760
    %384 = vmatprep.subr.mxu0 %v383
    %v385 = vand.u32 %v24, 4294901760
    %v386 = vsub.f32 %v24, %v385
    %v387 = vand.u32 %v386, 4294901760
    %388 = vmatpush1.msra.mxu0 %v387
    %389 = vmatprep.subr.mxu0 0.0
    %390 = vmatpush1.msra.mxu0 0.0
    %391 = vmatprep.subr.mxu0 0.0
    %392 = vmatpush1.msra.mxu0 0.0
    %393 = vmatprep.subr.mxu0 0.0
    %394 = vmatpush1.msra.mxu0 0.0
    %395 = vmatprep.subr.mxu0 0.0
    %396 = vmatpush1.msra.mxu0 0.0
    %397 = vmatprep.subr.mxu0 0.0
    %398 = vmatpush1.msra.mxu0 0.0
    %399 = vmatprep.subr.mxu0 0.0
    %400 = vmatpush1.msra.mxu0 0.0
    %401 = vmatprep.subr.mxu0 0.0
    %402 = vmatpush1.msra.mxu0 0.0
    %403 = vmatprep.subr.mxu0 0.0
    %404 = vmatpush1.msra.mxu0 0.0
    %405 = vmatprep.subr.mxu0 0.0
    %406 = vmatpush1.msra.mxu0 0.0
    %407 = vmatprep.subr.mxu0 0.0
    %408 = vmatpush1.msra.mxu0 0.0
    %409 = vmatprep.subr.mxu0 0.0
    %410 = vmatpush1.msra.mxu0 0.0
    %411 = vmatprep.subr.mxu0 0.0
    %412 = vmatpush1.msra.mxu0 0.0
    %413 = vmatprep.subr.mxu0 0.0
    %414 = vmatpush1.msra.mxu0 0.0
    %415 = vmatprep.subr.mxu0 0.0
    %416 = vmatpush1.msra.mxu0 0.0
    %417 = vmatprep.subr.mxu0 0.0
    %418 = vmatpush1.msra.mxu0 0.0
    %419 = vmatprep.subr.mxu0 0.0
    %420 = vmatpush1.msra.mxu0 0.0
    %421 = vmatprep.subr.mxu0 0.0
    %422 = vmatpush1.msra.mxu0 0.0
    %423 = vmatprep.subr.mxu0 0.0
    %424 = vmatpush1.msra.mxu0 0.0
    %425 = vmatprep.subr.mxu0 0.0
    %426 = vmatpush1.msra.mxu0 0.0
    %427 = vmatprep.subr.mxu0 0.0
    %428 = vmatpush1.msra.mxu0 0.0
    %429 = vmatprep.subr.mxu0 0.0
    %430 = vmatpush1.msra.mxu0 0.0
    %431 = vmatprep.subr.mxu0 0.0
    %432 = vmatpush1.msra.mxu0 0.0
    %433 = vmatprep.subr.mxu0 0.0
    %434 = vmatpush1.msra.mxu0 0.0
    %435 = vmatprep.subr.mxu0 0.0
    %436 = vmatpush1.msra.mxu0 0.0
    %437 = vmatprep.subr.mxu0 0.0
    %438 = vmatpush1.msra.mxu0 0.0
    %439 = vmatprep.subr.mxu0 0.0
    %440 = vmatpush1.msra.mxu0 0.0
    %441 = vmatprep.subr.mxu0 0.0
    %442 = vmatpush1.msra.mxu0 0.0
    %443 = vmatprep.subr.mxu0 0.0
    %444 = vmatpush1.msra.mxu0 0.0
    %445 = vmatprep.subr.mxu0 0.0
    %446 = vmatpush1.msra.mxu0 0.0
    %447 = vmatprep.subr.mxu0 0.0
    %448 = vmatpush1.msra.mxu0 0.0
    %449 = vmatprep.mubr.f32.mxu0 0.0
    %v450 = vand.u32 %v40, 4294901760
    %451 = vmatmul.mubr.f32.gmra.mrb[0].mxu0 %v450
    %v452 = vpop.f32.mrb[0].mxu0
    %v453 = vadd.f32 %v369, %v452
    %v454 = vpop.f32.mrb[0].mxu0
    %v455 = vadd.f32 %v371, %v454
    %456 = vdwg.mxu0
    %v457 = vand.u32 %v23, 4294901760
    %458 = vmatprep.subr.mxu0 %v457
    %v459 = vand.u32 %v22, 4294901760
    %460 = vmatpush1.msra.mxu0 %v459
    %v461 = vand.u32 %v25, 4294901760
    %462 = vmatprep.subr.mxu0 %v461
    %v463 = vand.u32 %v24, 4294901760
    %464 = vmatpush1.msra.mxu0 %v463
    %465 = vmatprep.subr.mxu0 0.0
    %466 = vmatpush1.msra.mxu0 0.0
    %467 = vmatprep.subr.mxu0 0.0
    %468 = vmatpush1.msra.mxu0 0.0
    %469 = vmatprep.subr.mxu0 0.0
    %470 = vmatpush1.msra.mxu0 0.0
    %471 = vmatprep.subr.mxu0 0.0
    %472 = vmatpush1.msra.mxu0 0.0
    %473 = vmatprep.subr.mxu0 0.0
    %474 = vmatpush1.msra.mxu0 0.0
    %475 = vmatprep.subr.mxu0 0.0
    %476 = vmatpush1.msra.mxu0 0.0
    %477 = vmatprep.subr.mxu0 0.0
    %478 = vmatpush1.msra.mxu0 0.0
    %479 = vmatprep.subr.mxu0 0.0
    %480 = vmatpush1.msra.mxu0 0.0
    %481 = vmatprep.subr.mxu0 0.0
    %482 = vmatpush1.msra.mxu0 0.0
    %483 = vmatprep.subr.mxu0 0.0
    %484 = vmatpush1.msra.mxu0 0.0
    %485 = vmatprep.subr.mxu0 0.0
    %486 = vmatpush1.msra.mxu0 0.0
    %487 = vmatprep.subr.mxu0 0.0
    %488 = vmatpush1.msra.mxu0 0.0
    %489 = vmatprep.subr.mxu0 0.0
    %490 = vmatpush1.msra.mxu0 0.0
    %491 = vmatprep.subr.mxu0 0.0
    %492 = vmatpush1.msra.mxu0 0.0
    %493 = vmatprep.subr.mxu0 0.0
    %494 = vmatpush1.msra.mxu0 0.0
    %495 = vmatprep.subr.mxu0 0.0
    %496 = vmatpush1.msra.mxu0 0.0
    %497 = vmatprep.subr.mxu0 0.0
    %498 = vmatpush1.msra.mxu0 0.0
    %499 = vmatprep.subr.mxu0 0.0
    %500 = vmatpush1.msra.mxu0 0.0
    %501 = vmatprep.subr.mxu0 0.0
    %502 = vmatpush1.msra.mxu0 0.0
    %503 = vmatprep.subr.mxu0 0.0
    %504 = vmatpush1.msra.mxu0 0.0
    %505 = vmatprep.subr.mxu0 0.0
    %506 = vmatpush1.msra.mxu0 0.0
    %507 = vmatprep.subr.mxu0 0.0
    %508 = vmatpush1.msra.mxu0 0.0
    %509 = vmatprep.subr.mxu0 0.0
    %510 = vmatpush1.msra.mxu0 0.0
    %511 = vmatprep.subr.mxu0 0.0
    %512 = vmatpush1.msra.mxu0 0.0
    %513 = vmatprep.subr.mxu0 0.0
    %514 = vmatpush1.msra.mxu0 0.0
    %515 = vmatprep.subr.mxu0 0.0
    %516 = vmatpush1.msra.mxu0 0.0
    %517 = vmatprep.subr.mxu0 0.0
    %518 = vmatpush1.msra.mxu0 0.0
    %519 = vmatprep.subr.mxu0 0.0
    %520 = vmatpush1.msra.mxu0 0.0
    %521 = vmatprep.subr.mxu0 0.0
    %522 = vmatpush1.msra.mxu0 0.0
    %523 = vmatprep.subr.mxu0 0.0
    %524 = vmatpush1.msra.mxu0 0.0
    %525 = vmatprep.mubr.f32.mxu0 0.0
    %v526 = vand.u32 %v40, 4294901760
    %527 = vmatmul.mubr.f32.gmra.mrb[0].mxu0 %v526
    %v528 = vpop.f32.mrb[0].mxu0
    %v529 = vadd.f32 %v453, %v528
    %v530 = vpop.f32.mrb[0].mxu0
    %v531 = vadd.f32 %v455, %v530
    %532 = vdwg.mxu0
    %v533 = vmax.f32 %v529, 0.0
    %v534 = vmax.f32 %v531, 0.0
    %v535 = vld [vmem:[%s3] sm:$0xff]
    %v536 = vld [vmem:[%s3 + $0x8] sm:$0xff]
    %v537 = vld [vmem:[%s3 + $0x10] sm:$0xff]
    %v538 = vld [vmem:[%s3 + $0x18] sm:$0xff]
    %v539 = vld [vmem:[%s3 + $0x20] sm:$0xff]
    %v540 = vld [vmem:[%s3 + $0x28] sm:$0xff]
    %v541 = vld [vmem:[%s3 + $0x30] sm:$0xff]
    %v542 = vld [vmem:[%s3 + $0x38] sm:$0xff]
    %v543 = vld [vmem:[%s3 + $0x40] sm:$0xff]
    %v544 = vld [vmem:[%s3 + $0x48] sm:$0xff]
    %v545 = vld [vmem:[%s3 + $0x50] sm:$0xff]
    %v546 = vld [vmem:[%s3 + $0x58] sm:$0xff]
    %v547 = vld [vmem:[%s3 + $0x60] sm:$0xff]
    %v548 = vld [vmem:[%s3 + $0x68] sm:$0xff]
    %v549 = vld [vmem:[%s3 + $0x70] sm:$0xff]
    %v550 = vld [vmem:[%s3 + $0x78] sm:$0xff]
    %v551 = vld [vmem:[%s3 + $0x80] sm:$0xff]
    %v552 = vld [vmem:[%s3 + $0x88] sm:$0xff]
    %v553 = vld [vmem:[%s3 + $0x90] sm:$0xff]
    %v554 = vld [vmem:[%s3 + $0x98] sm:$0xff]
    %v555 = vld [vmem:[%s3 + $0xa0] sm:$0xff]
    %v556 = vld [vmem:[%s3 + $0xa8] sm:$0xff]
    %v557 = vld [vmem:[%s3 + $0xb0] sm:$0xff]
    %v558 = vld [vmem:[%s3 + $0xb8] sm:$0xff]
    %v559 = vld [vmem:[%s3 + $0xc0] sm:$0xff]
    %v560 = vld [vmem:[%s3 + $0xc8] sm:$0xff]
    %v561 = vld [vmem:[%s3 + $0xd0] sm:$0xff]
    %v562 = vld [vmem:[%s3 + $0xd8] sm:$0xff]
    %v563 = vld [vmem:[%s3 + $0xe0] sm:$0xff]
    %v564 = vld [vmem:[%s3 + $0xe8] sm:$0xff]
    %v565 = vld [vmem:[%s3 + $0xf0] sm:$0xff]
    %v566 = vld [vmem:[%s3 + $0xf8] sm:$0xff]
    %v567 = vld [vmem:[%s4] sm:$0x1]
    %v569 = vlaneseq
    %v570 = vshrl.u32 %v569, 7
    %v571 = vsub.s32 0, %v570
    %v572 = vrot.slane %v567, %v571
    %574 = vmatprep.subr.mxu0 0.0
    %v575 = vand.u32 %v535, 4294901760
    %576 = vmatpush1.msra.mxu0 %v575
    %577 = vmatprep.subr.mxu0 0.0
    %v578 = vand.u32 %v536, 4294901760
    %579 = vmatpush1.msra.mxu0 %v578
    %580 = vmatprep.subr.mxu0 0.0
    %v581 = vand.u32 %v537, 4294901760
    %582 = vmatpush1.msra.mxu0 %v581
    %583 = vmatprep.subr.mxu0 0.0
    %v584 = vand.u32 %v538, 4294901760
    %585 = vmatpush1.msra.mxu0 %v584
    %586 = vmatprep.subr.mxu0 0.0
    %v587 = vand.u32 %v539, 4294901760
    %588 = vmatpush1.msra.mxu0 %v587
    %589 = vmatprep.subr.mxu0 0.0
    %v590 = vand.u32 %v540, 4294901760
    %591 = vmatpush1.msra.mxu0 %v590
    %592 = vmatprep.subr.mxu0 0.0
    %v593 = vand.u32 %v541, 4294901760
    %594 = vmatpush1.msra.mxu0 %v593
    %595 = vmatprep.subr.mxu0 0.0
    %v596 = vand.u32 %v542, 4294901760
    %597 = vmatpush1.msra.mxu0 %v596
    %598 = vmatprep.subr.mxu0 0.0
    %v599 = vand.u32 %v543, 4294901760
    %600 = vmatpush1.msra.mxu0 %v599
    %601 = vmatprep.subr.mxu0 0.0
    %v602 = vand.u32 %v544, 4294901760
    %603 = vmatpush1.msra.mxu0 %v602
    %604 = vmatprep.subr.mxu0 0.0
    %v605 = vand.u32 %v545, 4294901760
    %606 = vmatpush1.msra.mxu0 %v605
    %607 = vmatprep.subr.mxu0 0.0
    %v608 = vand.u32 %v546, 4294901760
    %609 = vmatpush1.msra.mxu0 %v608
    %610 = vmatprep.subr.mxu0 0.0
    %v611 = vand.u32 %v547, 4294901760
    %612 = vmatpush1.msra.mxu0 %v611
    %613 = vmatprep.subr.mxu0 0.0
    %v614 = vand.u32 %v548, 4294901760
    %615 = vmatpush1.msra.mxu0 %v614
    %616 = vmatprep.subr.mxu0 0.0
    %v617 = vand.u32 %v549, 4294901760
    %618 = vmatpush1.msra.mxu0 %v617
    %619 = vmatprep.subr.mxu0 0.0
    %v620 = vand.u32 %v550, 4294901760
    %621 = vmatpush1.msra.mxu0 %v620
    %622 = vmatprep.subr.mxu0 0.0
    %v623 = vand.u32 %v551, 4294901760
    %624 = vmatpush1.msra.mxu0 %v623
    %625 = vmatprep.subr.mxu0 0.0
    %v626 = vand.u32 %v552, 4294901760
    %627 = vmatpush1.msra.mxu0 %v626
    %628 = vmatprep.subr.mxu0 0.0
    %v629 = vand.u32 %v553, 4294901760
    %630 = vmatpush1.msra.mxu0 %v629
    %631 = vmatprep.subr.mxu0 0.0
    %v632 = vand.u32 %v554, 4294901760
    %633 = vmatpush1.msra.mxu0 %v632
    %634 = vmatprep.subr.mxu0 0.0
    %v635 = vand.u32 %v555, 4294901760
    %636 = vmatpush1.msra.mxu0 %v635
    %637 = vmatprep.subr.mxu0 0.0
    %v638 = vand.u32 %v556, 4294901760
    %639 = vmatpush1.msra.mxu0 %v638
    %640 = vmatprep.subr.mxu0 0.0
    %v641 = vand.u32 %v557, 4294901760
    %642 = vmatpush1.msra.mxu0 %v641
    %643 = vmatprep.subr.mxu0 0.0
    %v644 = vand.u32 %v558, 4294901760
    %645 = vmatpush1.msra.mxu0 %v644
    %646 = vmatprep.subr.mxu0 0.0
    %v647 = vand.u32 %v559, 4294901760
    %648 = vmatpush1.msra.mxu0 %v647
    %649 = vmatprep.subr.mxu0 0.0
    %v650 = vand.u32 %v560, 4294901760
    %651 = vmatpush1.msra.mxu0 %v650
    %652 = vmatprep.subr.mxu0 0.0
    %v653 = vand.u32 %v561, 4294901760
    %654 = vmatpush1.msra.mxu0 %v653
    %655 = vmatprep.subr.mxu0 0.0
    %v656 = vand.u32 %v562, 4294901760
    %657 = vmatpush1.msra.mxu0 %v656
    %658 = vmatprep.subr.mxu0 0.0
    %v659 = vand.u32 %v563, 4294901760
    %660 = vmatpush1.msra.mxu0 %v659
    %661 = vmatprep.subr.mxu0 0.0
    %v662 = vand.u32 %v564, 4294901760
    %663 = vmatpush1.msra.mxu0 %v662
    %664 = vmatprep.subr.mxu0 0.0
    %v665 = vand.u32 %v565, 4294901760
    %666 = vmatpush1.msra.mxu0 %v665
    %667 = vmatprep.subr.mxu0 0.0
    %v668 = vand.u32 %v566, 4294901760
    %669 = vmatpush1.msra.mxu0 %v668
    %v670 = vand.u32 %v534, 4294901760
    %v671 = vsub.f32 %v534, %v670
    %v672 = vand.u32 %v671, 4294901760
    %v673 = vsub.f32 %v671, %v672
    %v674 = vand.u32 %v673, 4294901760
    %675 = vmatprep.mubr.f32.mxu0 %v674
    %v676 = vand.u32 %v533, 4294901760
    %v677 = vsub.f32 %v533, %v676
    %v678 = vand.u32 %v677, 4294901760
    %v679 = vsub.f32 %v677, %v678
    %v680 = vand.u32 %v679, 4294901760
    %681 = vmatmul.mubr.f32.gmra.mrb[0].mxu0 %v680
    %v682 = vpop.f32.mrb[0].mxu0
    %v683 = vadd.f32 %v572, %v682
    %v684 = vpop.f32.mrb[0].mxu0
    %685 = vdwg.mxu0
    %686 = vmatprep.subr.mxu0 0.0
    %v687 = vand.u32 %v535, 4294901760
    %v688 = vsub.f32 %v535, %v687
    %v689 = vand.u32 %v688, 4294901760
    %v690 = vsub.f32 %v688, %v689
    %v691 = vand.u32 %v690, 4294901760
    %692 = vmatpush1.msra.mxu0 %v691
    %693 = vmatprep.subr.mxu0 0.0
    %v694 = vand.u32 %v536, 4294901760
    %v695 = vsub.f32 %v536, %v694
    %v696 = vand.u32 %v695, 4294901760
    %v697 = vsub.f32 %v695, %v696
    %v698 = vand.u32 %v697, 4294901760
    %699 = vmatpush1.msra.mxu0 %v698
    %700 = vmatprep.subr.mxu0 0.0
    %v701 = vand.u32 %v537, 4294901760
    %v702 = vsub.f32 %v537, %v701
    %v703 = vand.u32 %v702, 4294901760
    %v704 = vsub.f32 %v702, %v703
    %v705 = vand.u32 %v704, 4294901760
    %706 = vmatpush1.msra.mxu0 %v705
    %707 = vmatprep.subr.mxu0 0.0
    %v708 = vand.u32 %v538, 4294901760
    %v709 = vsub.f32 %v538, %v708
    %v710 = vand.u32 %v709, 4294901760
    %v711 = vsub.f32 %v709, %v710
    %v712 = vand.u32 %v711, 4294901760
    %713 = vmatpush1.msra.mxu0 %v712
    %714 = vmatprep.subr.mxu0 0.0
    %v715 = vand.u32 %v539, 4294901760
    %v716 = vsub.f32 %v539, %v715
    %v717 = vand.u32 %v716, 4294901760
    %v718 = vsub.f32 %v716, %v717
    %v719 = vand.u32 %v718, 4294901760
    %720 = vmatpush1.msra.mxu0 %v719
    %721 = vmatprep.subr.mxu0 0.0
    %v722 = vand.u32 %v540, 4294901760
    %v723 = vsub.f32 %v540, %v722
    %v724 = vand.u32 %v723, 4294901760
    %v725 = vsub.f32 %v723, %v724
    %v726 = vand.u32 %v725, 4294901760
    %727 = vmatpush1.msra.mxu0 %v726
    %728 = vmatprep.subr.mxu0 0.0
    %v729 = vand.u32 %v541, 4294901760
    %v730 = vsub.f32 %v541, %v729
    %v731 = vand.u32 %v730, 4294901760
    %v732 = vsub.f32 %v730, %v731
    %v733 = vand.u32 %v732, 4294901760
    %734 = vmatpush1.msra.mxu0 %v733
    %735 = vmatprep.subr.mxu0 0.0
    %v736 = vand.u32 %v542, 4294901760
    %v737 = vsub.f32 %v542, %v736
    %v738 = vand.u32 %v737, 4294901760
    %v739 = vsub.f32 %v737, %v738
    %v740 = vand.u32 %v739, 4294901760
    %741 = vmatpush1.msra.mxu0 %v740
    %742 = vmatprep.subr.mxu0 0.0
    %v743 = vand.u32 %v543, 4294901760
    %v744 = vsub.f32 %v543, %v743
    %v745 = vand.u32 %v744, 4294901760
    %v746 = vsub.f32 %v744, %v745
    %v747 = vand.u32 %v746, 4294901760
    %748 = vmatpush1.msra.mxu0 %v747
    %749 = vmatprep.subr.mxu0 0.0
    %v750 = vand.u32 %v544, 4294901760
    %v751 = vsub.f32 %v544, %v750
    %v752 = vand.u32 %v751, 4294901760
    %v753 = vsub.f32 %v751, %v752
    %v754 = vand.u32 %v753, 4294901760
    %755 = vmatpush1.msra.mxu0 %v754
    %756 = vmatprep.subr.mxu0 0.0
    %v757 = vand.u32 %v545, 4294901760
    %v758 = vsub.f32 %v545, %v757
    %v759 = vand.u32 %v758, 4294901760
    %v760 = vsub.f32 %v758, %v759
    %v761 = vand.u32 %v760, 4294901760
    %762 = vmatpush1.msra.mxu0 %v761
    %763 = vmatprep.subr.mxu0 0.0
    %v764 = vand.u32 %v546, 4294901760
    %v765 = vsub.f32 %v546, %v764
    %v766 = vand.u32 %v765, 4294901760
    %v767 = vsub.f32 %v765, %v766
    %v768 = vand.u32 %v767, 4294901760
    %769 = vmatpush1.msra.mxu0 %v768
    %770 = vmatprep.subr.mxu0 0.0
    %v771 = vand.u32 %v547, 4294901760
    %v772 = vsub.f32 %v547, %v771
    %v773 = vand.u32 %v772, 4294901760
    %v774 = vsub.f32 %v772, %v773
    %v775 = vand.u32 %v774, 4294901760
    %776 = vmatpush1.msra.mxu0 %v775
    %777 = vmatprep.subr.mxu0 0.0
    %v778 = vand.u32 %v548, 4294901760
    %v779 = vsub.f32 %v548, %v778
    %v780 = vand.u32 %v779, 4294901760
    %v781 = vsub.f32 %v779, %v780
    %v782 = vand.u32 %v781, 4294901760
    %783 = vmatpush1.msra.mxu0 %v782
    %784 = vmatprep.subr.mxu0 0.0
    %v785 = vand.u32 %v549, 4294901760
    %v786 = vsub.f32 %v549, %v785
    %v787 = vand.u32 %v786, 4294901760
    %v788 = vsub.f32 %v786, %v787
    %v789 = vand.u32 %v788, 4294901760
    %790 = vmatpush1.msra.mxu0 %v789
    %791 = vmatprep.subr.mxu0 0.0
    %v792 = vand.u32 %v550, 4294901760
    %v793 = vsub.f32 %v550, %v792
    %v794 = vand.u32 %v793, 4294901760
    %v795 = vsub.f32 %v793, %v794
    %v796 = vand.u32 %v795, 4294901760
    %797 = vmatpush1.msra.mxu0 %v796
    %798 = vmatprep.subr.mxu0 0.0
    %v799 = vand.u32 %v551, 4294901760
    %v800 = vsub.f32 %v551, %v799
    %v801 = vand.u32 %v800, 4294901760
    %v802 = vsub.f32 %v800, %v801
    %v803 = vand.u32 %v802, 4294901760
    %804 = vmatpush1.msra.mxu0 %v803
    %805 = vmatprep.subr.mxu0 0.0
    %v806 = vand.u32 %v552, 4294901760
    %v807 = vsub.f32 %v552, %v806
    %v808 = vand.u32 %v807, 4294901760
    %v809 = vsub.f32 %v807, %v808
    %v810 = vand.u32 %v809, 4294901760
    %811 = vmatpush1.msra.mxu0 %v810
    %812 = vmatprep.subr.mxu0 0.0
    %v813 = vand.u32 %v553, 4294901760
    %v814 = vsub.f32 %v553, %v813
    %v815 = vand.u32 %v814, 4294901760
    %v816 = vsub.f32 %v814, %v815
    %v817 = vand.u32 %v816, 4294901760
    %818 = vmatpush1.msra.mxu0 %v817
    %819 = vmatprep.subr.mxu0 0.0
    %v820 = vand.u32 %v554, 4294901760
    %v821 = vsub.f32 %v554, %v820
    %v822 = vand.u32 %v821, 4294901760
    %v823 = vsub.f32 %v821, %v822
    %v824 = vand.u32 %v823, 4294901760
    %825 = vmatpush1.msra.mxu0 %v824
    %826 = vmatprep.subr.mxu0 0.0
    %v827 = vand.u32 %v555, 4294901760
    %v828 = vsub.f32 %v555, %v827
    %v829 = vand.u32 %v828, 4294901760
    %v830 = vsub.f32 %v828, %v829
    %v831 = vand.u32 %v830, 4294901760
    %832 = vmatpush1.msra.mxu0 %v831
    %833 = vmatprep.subr.mxu0 0.0
    %v834 = vand.u32 %v556, 4294901760
    %v835 = vsub.f32 %v556, %v834
    %v836 = vand.u32 %v835, 4294901760
    %v837 = vsub.f32 %v835, %v836
    %v838 = vand.u32 %v837, 4294901760
    %839 = vmatpush1.msra.mxu0 %v838
    %840 = vmatprep.subr.mxu0 0.0
    %v841 = vand.u32 %v557, 4294901760
    %v842 = vsub.f32 %v557, %v841
    %v843 = vand.u32 %v842, 4294901760
    %v844 = vsub.f32 %v842, %v843
    %v845 = vand.u32 %v844, 4294901760
    %846 = vmatpush1.msra.mxu0 %v845
    %847 = vmatprep.subr.mxu0 0.0
    %v848 = vand.u32 %v558, 4294901760
    %v849 = vsub.f32 %v558, %v848
    %v850 = vand.u32 %v849, 4294901760
    %v851 = vsub.f32 %v849, %v850
    %v852 = vand.u32 %v851, 4294901760
    %853 = vmatpush1.msra.mxu0 %v852
    %854 = vmatprep.subr.mxu0 0.0
    %v855 = vand.u32 %v559, 4294901760
    %v856 = vsub.f32 %v559, %v855
    %v857 = vand.u32 %v856, 4294901760
    %v858 = vsub.f32 %v856, %v857
    %v859 = vand.u32 %v858, 4294901760
    %860 = vmatpush1.msra.mxu0 %v859
    %861 = vmatprep.subr.mxu0 0.0
    %v862 = vand.u32 %v560, 4294901760
    %v863 = vsub.f32 %v560, %v862
    %v864 = vand.u32 %v863, 4294901760
    %v865 = vsub.f32 %v863, %v864
    %v866 = vand.u32 %v865, 4294901760
    %867 = vmatpush1.msra.mxu0 %v866
    %868 = vmatprep.subr.mxu0 0.0
    %v869 = vand.u32 %v561, 4294901760
    %v870 = vsub.f32 %v561, %v869
    %v871 = vand.u32 %v870, 4294901760
    %v872 = vsub.f32 %v870, %v871
    %v873 = vand.u32 %v872, 4294901760
    %874 = vmatpush1.msra.mxu0 %v873
    %875 = vmatprep.subr.mxu0 0.0
    %v876 = vand.u32 %v562, 4294901760
    %v877 = vsub.f32 %v562, %v876
    %v878 = vand.u32 %v877, 4294901760
    %v879 = vsub.f32 %v877, %v878
    %v880 = vand.u32 %v879, 4294901760
    %881 = vmatpush1.msra.mxu0 %v880
    %882 = vmatprep.subr.mxu0 0.0
    %v883 = vand.u32 %v563, 4294901760
    %v884 = vsub.f32 %v563, %v883
    %v885 = vand.u32 %v884, 4294901760
    %v886 = vsub.f32 %v884, %v885
    %v887 = vand.u32 %v886, 4294901760
    %888 = vmatpush1.msra.mxu0 %v887
    %889 = vmatprep.subr.mxu0 0.0
    %v890 = vand.u32 %v564, 4294901760
    %v891 = vsub.f32 %v564, %v890
    %v892 = vand.u32 %v891, 4294901760
    %v893 = vsub.f32 %v891, %v892
    %v894 = vand.u32 %v893, 4294901760
    %895 = vmatpush1.msra.mxu0 %v894
    %896 = vmatprep.subr.mxu0 0.0
    %v897 = vand.u32 %v565, 4294901760
    %v898 = vsub.f32 %v565, %v897
    %v899 = vand.u32 %v898, 4294901760
    %v900 = vsub.f32 %v898, %v899
    %v901 = vand.u32 %v900, 4294901760
    %902 = vmatpush1.msra.mxu0 %v901
    %903 = vmatprep.subr.mxu0 0.0
    %v904 = vand.u32 %v566, 4294901760
    %v905 = vsub.f32 %v566, %v904
    %v906 = vand.u32 %v905, 4294901760
    %v907 = vsub.f32 %v905, %v906
    %v908 = vand.u32 %v907, 4294901760
    %909 = vmatpush1.msra.mxu0 %v908
    %v910 = vand.u32 %v534, 4294901760
    %911 = vmatprep.mubr.f32.mxu0 %v910
    %v912 = vand.u32 %v533, 4294901760
    %913 = vmatmul.mubr.f32.gmra.mrb[0].mxu0 %v912
    %v914 = vpop.f32.mrb[0].mxu0
    %v915 = vadd.f32 %v683, %v914
    %v916 = vpop.f32.mrb[0].mxu0
    %917 = vdwg.mxu0
    %918 = vmatprep.subr.mxu0 0.0
    %v919 = vand.u32 %v535, 4294901760
    %v920 = vsub.f32 %v535, %v919
    %921 = vmatpush1.msra.mxu0 %v920
    %922 = vmatprep.subr.mxu0 0.0
    %v923 = vand.u32 %v536, 4294901760
    %v924 = vsub.f32 %v536, %v923
    %925 = vmatpush1.msra.mxu0 %v924
    %926 = vmatprep.subr.mxu0 0.0
    %v927 = vand.u32 %v537, 4294901760
    %v928 = vsub.f32 %v537, %v927
    %929 = vmatpush1.msra.mxu0 %v928
    %930 = vmatprep.subr.mxu0 0.0
    %v931 = vand.u32 %v538, 4294901760
    %v932 = vsub.f32 %v538, %v931
    %933 = vmatpush1.msra.mxu0 %v932
    %934 = vmatprep.subr.mxu0 0.0
    %v935 = vand.u32 %v539, 4294901760
    %v936 = vsub.f32 %v539, %v935
    %937 = vmatpush1.msra.mxu0 %v936
    %938 = vmatprep.subr.mxu0 0.0
    %v939 = vand.u32 %v540, 4294901760
    %v940 = vsub.f32 %v540, %v939
    %941 = vmatpush1.msra.mxu0 %v940
    %942 = vmatprep.subr.mxu0 0.0
    %v943 = vand.u32 %v541, 4294901760
    %v944 = vsub.f32 %v541, %v943
    %945 = vmatpush1.msra.mxu0 %v944
    %946 = vmatprep.subr.mxu0 0.0
    %v947 = vand.u32 %v542, 4294901760
    %v948 = vsub.f32 %v542, %v947
    %949 = vmatpush1.msra.mxu0 %v948
    %950 = vmatprep.subr.mxu0 0.0
    %v951 = vand.u32 %v543, 4294901760
    %v952 = vsub.f32 %v543, %v951
    %953 = vmatpush1.msra.mxu0 %v952
    %954 = vmatprep.subr.mxu0 0.0
    %v955 = vand.u32 %v544, 4294901760
    %v956 = vsub.f32 %v544, %v955
    %957 = vmatpush1.msra.mxu0 %v956
    %958 = vmatprep.subr.mxu0 0.0
    %v959 = vand.u32 %v545, 4294901760
    %v960 = vsub.f32 %v545, %v959
    %961 = vmatpush1.msra.mxu0 %v960
    %962 = vmatprep.subr.mxu0 0.0
    %v963 = vand.u32 %v546, 4294901760
    %v964 = vsub.f32 %v546, %v963
    %965 = vmatpush1.msra.mxu0 %v964
    %966 = vmatprep.subr.mxu0 0.0
    %v967 = vand.u32 %v547, 4294901760
    %v968 = vsub.f32 %v547, %v967
    %969 = vmatpush1.msra.mxu0 %v968
    %970 = vmatprep.subr.mxu0 0.0
    %v971 = vand.u32 %v548, 4294901760
    %v972 = vsub.f32 %v548, %v971
    %973 = vmatpush1.msra.mxu0 %v972
    %974 = vmatprep.subr.mxu0 0.0
    %v975 = vand.u32 %v549, 4294901760
    %v976 = vsub.f32 %v549, %v975
    %977 = vmatpush1.msra.mxu0 %v976
    %978 = vmatprep.subr.mxu0 0.0
    %v979 = vand.u32 %v550, 4294901760
    %v980 = vsub.f32 %v550, %v979
    %981 = vmatpush1.msra.mxu0 %v980
    %982 = vmatprep.subr.mxu0 0.0
    %v983 = vand.u32 %v551, 4294901760
    %v984 = vsub.f32 %v551, %v983
    %985 = vmatpush1.msra.mxu0 %v984
    %986 = vmatprep.subr.mxu0 0.0
    %v987 = vand.u32 %v552, 4294901760
    %v988 = vsub.f32 %v552, %v987
    %989 = vmatpush1.msra.mxu0 %v988
    %990 = vmatprep.subr.mxu0 0.0
    %v991 = vand.u32 %v553, 4294901760
    %v992 = vsub.f32 %v553, %v991
    %993 = vmatpush1.msra.mxu0 %v992
    %994 = vmatprep.subr.mxu0 0.0
    %v995 = vand.u32 %v554, 4294901760
    %v996 = vsub.f32 %v554, %v995
    %997 = vmatpush1.msra.mxu0 %v996
    %998 = vmatprep.subr.mxu0 0.0
    %v999 = vand.u32 %v555, 4294901760
    %v1000 = vsub.f32 %v555, %v999
    %1001 = vmatpush1.msra.mxu0 %v1000
    %1002 = vmatprep.subr.mxu0 0.0
    %v1003 = vand.u32 %v556, 4294901760
    %v1004 = vsub.f32 %v556, %v1003
    %1005 = vmatpush1.msra.mxu0 %v1004
    %1006 = vmatprep.subr.mxu0 0.0
    %v1007 = vand.u32 %v557, 4294901760
    %v1008 = vsub.f32 %v557, %v1007
    %1009 = vmatpush1.msra.mxu0 %v1008
    %1010 = vmatprep.subr.mxu0 0.0
    %v1011 = vand.u32 %v558, 4294901760
    %v1012 = vsub.f32 %v558, %v1011
    %1013 = vmatpush1.msra.mxu0 %v1012
    %1014 = vmatprep.subr.mxu0 0.0
    %v1015 = vand.u32 %v559, 4294901760
    %v1016 = vsub.f32 %v559, %v1015
    %1017 = vmatpush1.msra.mxu0 %v1016
    %1018 = vmatprep.subr.mxu0 0.0
    %v1019 = vand.u32 %v560, 4294901760
    %v1020 = vsub.f32 %v560, %v1019
    %1021 = vmatpush1.msra.mxu0 %v1020
    %1022 = vmatprep.subr.mxu0 0.0
    %v1023 = vand.u32 %v561, 4294901760
    %v1024 = vsub.f32 %v561, %v1023
    %1025 = vmatpush1.msra.mxu0 %v1024
    %1026 = vmatprep.subr.mxu0 0.0
    %v1027 = vand.u32 %v562, 4294901760
    %v1028 = vsub.f32 %v562, %v1027
    %1029 = vmatpush1.msra.mxu0 %v1028
    %1030 = vmatprep.subr.mxu0 0.0
    %v1031 = vand.u32 %v563, 4294901760
    %v1032 = vsub.f32 %v563, %v1031
    %1033 = vmatpush1.msra.mxu0 %v1032
    %1034 = vmatprep.subr.mxu0 0.0
    %v1035 = vand.u32 %v564, 4294901760
    %v1036 = vsub.f32 %v564, %v1035
    %1037 = vmatpush1.msra.mxu0 %v1036
    %1038 = vmatprep.subr.mxu0 0.0
    %v1039 = vand.u32 %v565, 4294901760
    %v1040 = vsub.f32 %v565, %v1039
    %1041 = vmatpush1.msra.mxu0 %v1040
    %1042 = vmatprep.subr.mxu0 0.0
    %v1043 = vand.u32 %v566, 4294901760
    %v1044 = vsub.f32 %v566, %v1043
    %1045 = vmatpush1.msra.mxu0 %v1044
    %v1046 = vand.u32 %v534, 4294901760
    %v1047 = vsub.f32 %v534, %v1046
    %1048 = vmatprep.mubr.f32.mxu0 %v1047
    %v1049 = vand.u32 %v533, 4294901760
    %v1050 = vsub.f32 %v533, %v1049
    %1051 = vmatmul.mubr.f32.gmra.mrb[0].mxu0 %v1050
    %v1052 = vpop.f32.mrb[0].mxu0
    %v1053 = vadd.f32 %v915, %v1052
    %v1054 = vpop.f32.mrb[0].mxu0
    %1055 = vdwg.mxu0
    %1056 = vmatprep.subr.mxu0 0.0
    %v1057 = vand.u32 %v535, 4294901760
    %1058 = vmatpush1.msra.mxu0 %v1057
    %1059 = vmatprep.subr.mxu0 0.0
    %v1060 = vand.u32 %v536, 4294901760
    %1061 = vmatpush1.msra.mxu0 %v1060
    %1062 = vmatprep.subr.mxu0 0.0
    %v1063 = vand.u32 %v537, 4294901760
    %1064 = vmatpush1.msra.mxu0 %v1063
    %1065 = vmatprep.subr.mxu0 0.0
    %v1066 = vand.u32 %v538, 4294901760
    %1067 = vmatpush1.msra.mxu0 %v1066
    %1068 = vmatprep.subr.mxu0 0.0
    %v1069 = vand.u32 %v539, 4294901760
    %1070 = vmatpush1.msra.mxu0 %v1069
    %1071 = vmatprep.subr.mxu0 0.0
    %v1072 = vand.u32 %v540, 4294901760
    %1073 = vmatpush1.msra.mxu0 %v1072
    %1074 = vmatprep.subr.mxu0 0.0
    %v1075 = vand.u32 %v541, 4294901760
    %1076 = vmatpush1.msra.mxu0 %v1075
    %1077 = vmatprep.subr.mxu0 0.0
    %v1078 = vand.u32 %v542, 4294901760
    %1079 = vmatpush1.msra.mxu0 %v1078
    %1080 = vmatprep.subr.mxu0 0.0
    %v1081 = vand.u32 %v543, 4294901760
    %1082 = vmatpush1.msra.mxu0 %v1081
    %1083 = vmatprep.subr.mxu0 0.0
    %v1084 = vand.u32 %v544, 4294901760
    %1085 = vmatpush1.msra.mxu0 %v1084
    %1086 = vmatprep.subr.mxu0 0.0
    %v1087 = vand.u32 %v545, 4294901760
    %1088 = vmatpush1.msra.mxu0 %v1087
    %1089 = vmatprep.subr.mxu0 0.0
    %v1090 = vand.u32 %v546, 4294901760
    %1091 = vmatpush1.msra.mxu0 %v1090
    %1092 = vmatprep.subr.mxu0 0.0
    %v1093 = vand.u32 %v547, 4294901760
    %1094 = vmatpush1.msra.mxu0 %v1093
    %1095 = vmatprep.subr.mxu0 0.0
    %v1096 = vand.u32 %v548, 4294901760
    %1097 = vmatpush1.msra.mxu0 %v1096
    %1098 = vmatprep.subr.mxu0 0.0
    %v1099 = vand.u32 %v549, 4294901760
    %1100 = vmatpush1.msra.mxu0 %v1099
    %1101 = vmatprep.subr.mxu0 0.0
    %v1102 = vand.u32 %v550, 4294901760
    %1103 = vmatpush1.msra.mxu0 %v1102
    %1104 = vmatprep.subr.mxu0 0.0
    %v1105 = vand.u32 %v551, 4294901760
    %1106 = vmatpush1.msra.mxu0 %v1105
    %1107 = vmatprep.subr.mxu0 0.0
    %v1108 = vand.u32 %v552, 4294901760
    %1109 = vmatpush1.msra.mxu0 %v1108
    %1110 = vmatprep.subr.mxu0 0.0
    %v1111 = vand.u32 %v553, 4294901760
    %1112 = vmatpush1.msra.mxu0 %v1111
    %1113 = vmatprep.subr.mxu0 0.0
    %v1114 = vand.u32 %v554, 4294901760
    %1115 = vmatpush1.msra.mxu0 %v1114
    %1116 = vmatprep.subr.mxu0 0.0
    %v1117 = vand.u32 %v555, 4294901760
    %1118 = vmatpush1.msra.mxu0 %v1117
    %1119 = vmatprep.subr.mxu0 0.0
    %v1120 = vand.u32 %v556, 4294901760
    %1121 = vmatpush1.msra.mxu0 %v1120
    %1122 = vmatprep.subr.mxu0 0.0
    %v1123 = vand.u32 %v557, 4294901760
    %1124 = vmatpush1.msra.mxu0 %v1123
    %1125 = vmatprep.subr.mxu0 0.0
    %v1126 = vand.u32 %v558, 4294901760
    %1127 = vmatpush1.msra.mxu0 %v1126
    %1128 = vmatprep.subr.mxu0 0.0
    %v1129 = vand.u32 %v559, 4294901760
    %1130 = vmatpush1.msra.mxu0 %v1129
    %1131 = vmatprep.subr.mxu0 0.0
    %v1132 = vand.u32 %v560, 4294901760
    %1133 = vmatpush1.msra.mxu0 %v1132
    %1134 = vmatprep.subr.mxu0 0.0
    %v1135 = vand.u32 %v561, 4294901760
    %1136 = vmatpush1.msra.mxu0 %v1135
    %1137 = vmatprep.subr.mxu0 0.0
    %v1138 = vand.u32 %v562, 4294901760
    %1139 = vmatpush1.msra.mxu0 %v1138
    %1140 = vmatprep.subr.mxu0 0.0
    %v1141 = vand.u32 %v563, 4294901760
    %1142 = vmatpush1.msra.mxu0 %v1141
    %1143 = vmatprep.subr.mxu0 0.0
    %v1144 = vand.u32 %v564, 4294901760
    %1145 = vmatpush1.msra.mxu0 %v1144
    %1146 = vmatprep.subr.mxu0 0.0
    %v1147 = vand.u32 %v565, 4294901760
    %1148 = vmatpush1.msra.mxu0 %v1147
    %1149 = vmatprep.subr.mxu0 0.0
    %v1150 = vand.u32 %v566, 4294901760
    %1151 = vmatpush1.msra.mxu0 %v1150
    %v1152 = vand.u32 %v534, 4294901760
    %v1153 = vsub.f32 %v534, %v1152
    %v1154 = vand.u32 %v1153, 4294901760
    %1155 = vmatprep.mubr.f32.mxu0 %v1154
    %v1156 = vand.u32 %v533, 4294901760
    %v1157 = vsub.f32 %v533, %v1156
    %v1158 = vand.u32 %v1157, 4294901760
    %1159 = vmatmul.mubr.f32.gmra.mrb[0].mxu0 %v1158
    %v1160 = vpop.f32.mrb[0].mxu0
    %v1161 = vadd.f32 %v1053, %v1160
    %v1162 = vpop.f32.mrb[0].mxu0
    %1163 = vdwg.mxu0
    %1164 = vmatprep.subr.mxu0 0.0
    %v1165 = vand.u32 %v535, 4294901760
    %v1166 = vsub.f32 %v535, %v1165
    %v1167 = vand.u32 %v1166, 4294901760
    %1168 = vmatpush1.msra.mxu0 %v1167
    %1169 = vmatprep.subr.mxu0 0.0
    %v1170 = vand.u32 %v536, 4294901760
    %v1171 = vsub.f32 %v536, %v1170
    %v1172 = vand.u32 %v1171, 4294901760
    %1173 = vmatpush1.msra.mxu0 %v1172
    %1174 = vmatprep.subr.mxu0 0.0
    %v1175 = vand.u32 %v537, 4294901760
    %v1176 = vsub.f32 %v537, %v1175
    %v1177 = vand.u32 %v1176, 4294901760
    %1178 = vmatpush1.msra.mxu0 %v1177
    %1179 = vmatprep.subr.mxu0 0.0
    %v1180 = vand.u32 %v538, 4294901760
    %v1181 = vsub.f32 %v538, %v1180
    %v1182 = vand.u32 %v1181, 4294901760
    %1183 = vmatpush1.msra.mxu0 %v1182
    %1184 = vmatprep.subr.mxu0 0.0
    %v1185 = vand.u32 %v539, 4294901760
    %v1186 = vsub.f32 %v539, %v1185
    %v1187 = vand.u32 %v1186, 4294901760
    %1188 = vmatpush1.msra.mxu0 %v1187
    %1189 = vmatprep.subr.mxu0 0.0
    %v1190 = vand.u32 %v540, 4294901760
    %v1191 = vsub.f32 %v540, %v1190
    %v1192 = vand.u32 %v1191, 4294901760
    %1193 = vmatpush1.msra.mxu0 %v1192
    %1194 = vmatprep.subr.mxu0 0.0
    %v1195 = vand.u32 %v541, 4294901760
    %v1196 = vsub.f32 %v541, %v1195
    %v1197 = vand.u32 %v1196, 4294901760
    %1198 = vmatpush1.msra.mxu0 %v1197
    %1199 = vmatprep.subr.mxu0 0.0
    %v1200 = vand.u32 %v542, 4294901760
    %v1201 = vsub.f32 %v542, %v1200
    %v1202 = vand.u32 %v1201, 4294901760
    %1203 = vmatpush1.msra.mxu0 %v1202
    %1204 = vmatprep.subr.mxu0 0.0
    %v1205 = vand.u32 %v543, 4294901760
    %v1206 = vsub.f32 %v543, %v1205
    %v1207 = vand.u32 %v1206, 4294901760
    %1208 = vmatpush1.msra.mxu0 %v1207
    %1209 = vmatprep.subr.mxu0 0.0
    %v1210 = vand.u32 %v544, 4294901760
    %v1211 = vsub.f32 %v544, %v1210
    %v1212 = vand.u32 %v1211, 4294901760
    %1213 = vmatpush1.msra.mxu0 %v1212
    %1214 = vmatprep.subr.mxu0 0.0
    %v1215 = vand.u32 %v545, 4294901760
    %v1216 = vsub.f32 %v545, %v1215
    %v1217 = vand.u32 %v1216, 4294901760
    %1218 = vmatpush1.msra.mxu0 %v1217
    %1219 = vmatprep.subr.mxu0 0.0
    %v1220 = vand.u32 %v546, 4294901760
    %v1221 = vsub.f32 %v546, %v1220
    %v1222 = vand.u32 %v1221, 4294901760
    %1223 = vmatpush1.msra.mxu0 %v1222
    %1224 = vmatprep.subr.mxu0 0.0
    %v1225 = vand.u32 %v547, 4294901760
    %v1226 = vsub.f32 %v547, %v1225
    %v1227 = vand.u32 %v1226, 4294901760
    %1228 = vmatpush1.msra.mxu0 %v1227
    %1229 = vmatprep.subr.mxu0 0.0
    %v1230 = vand.u32 %v548, 4294901760
    %v1231 = vsub.f32 %v548, %v1230
    %v1232 = vand.u32 %v1231, 4294901760
    %1233 = vmatpush1.msra.mxu0 %v1232
    %1234 = vmatprep.subr.mxu0 0.0
    %v1235 = vand.u32 %v549, 4294901760
    %v1236 = vsub.f32 %v549, %v1235
    %v1237 = vand.u32 %v1236, 4294901760
    %1238 = vmatpush1.msra.mxu0 %v1237
    %1239 = vmatprep.subr.mxu0 0.0
    %v1240 = vand.u32 %v550, 4294901760
    %v1241 = vsub.f32 %v550, %v1240
    %v1242 = vand.u32 %v1241, 4294901760
    %1243 = vmatpush1.msra.mxu0 %v1242
    %1244 = vmatprep.subr.mxu0 0.0
    %v1245 = vand.u32 %v551, 4294901760
    %v1246 = vsub.f32 %v551, %v1245
    %v1247 = vand.u32 %v1246, 4294901760
    %1248 = vmatpush1.msra.mxu0 %v1247
    %1249 = vmatprep.subr.mxu0 0.0
    %v1250 = vand.u32 %v552, 4294901760
    %v1251 = vsub.f32 %v552, %v1250
    %v1252 = vand.u32 %v1251, 4294901760
    %1253 = vmatpush1.msra.mxu0 %v1252
    %1254 = vmatprep.subr.mxu0 0.0
    %v1255 = vand.u32 %v553, 4294901760
    %v1256 = vsub.f32 %v553, %v1255
    %v1257 = vand.u32 %v1256, 4294901760
    %1258 = vmatpush1.msra.mxu0 %v1257
    %1259 = vmatprep.subr.mxu0 0.0
    %v1260 = vand.u32 %v554, 4294901760
    %v1261 = vsub.f32 %v554, %v1260
    %v1262 = vand.u32 %v1261, 4294901760
    %1263 = vmatpush1.msra.mxu0 %v1262
    %1264 = vmatprep.subr.mxu0 0.0
    %v1265 = vand.u32 %v555, 4294901760
    %v1266 = vsub.f32 %v555, %v1265
    %v1267 = vand.u32 %v1266, 4294901760
    %1268 = vmatpush1.msra.mxu0 %v1267
    %1269 = vmatprep.subr.mxu0 0.0
    %v1270 = vand.u32 %v556, 4294901760
    %v1271 = vsub.f32 %v556, %v1270
    %v1272 = vand.u32 %v1271, 4294901760
    %1273 = vmatpush1.msra.mxu0 %v1272
    %1274 = vmatprep.subr.mxu0 0.0
    %v1275 = vand.u32 %v557, 4294901760
    %v1276 = vsub.f32 %v557, %v1275
    %v1277 = vand.u32 %v1276, 4294901760
    %1278 = vmatpush1.msra.mxu0 %v1277
    %1279 = vmatprep.subr.mxu0 0.0
    %v1280 = vand.u32 %v558, 4294901760
    %v1281 = vsub.f32 %v558, %v1280
    %v1282 = vand.u32 %v1281, 4294901760
    %1283 = vmatpush1.msra.mxu0 %v1282
    %1284 = vmatprep.subr.mxu0 0.0
    %v1285 = vand.u32 %v559, 4294901760
    %v1286 = vsub.f32 %v559, %v1285
    %v1287 = vand.u32 %v1286, 4294901760
    %1288 = vmatpush1.msra.mxu0 %v1287
    %1289 = vmatprep.subr.mxu0 0.0
    %v1290 = vand.u32 %v560, 4294901760
    %v1291 = vsub.f32 %v560, %v1290
    %v1292 = vand.u32 %v1291, 4294901760
    %1293 = vmatpush1.msra.mxu0 %v1292
    %1294 = vmatprep.subr.mxu0 0.0
    %v1295 = vand.u32 %v561, 4294901760
    %v1296 = vsub.f32 %v561, %v1295
    %v1297 = vand.u32 %v1296, 4294901760
    %1298 = vmatpush1.msra.mxu0 %v1297
    %1299 = vmatprep.subr.mxu0 0.0
    %v1300 = vand.u32 %v562, 4294901760
    %v1301 = vsub.f32 %v562, %v1300
    %v1302 = vand.u32 %v1301, 4294901760
    %1303 = vmatpush1.msra.mxu0 %v1302
    %1304 = vmatprep.subr.mxu0 0.0
    %v1305 = vand.u32 %v563, 4294901760
    %v1306 = vsub.f32 %v563, %v1305
    %v1307 = vand.u32 %v1306, 4294901760
    %1308 = vmatpush1.msra.mxu0 %v1307
    %1309 = vmatprep.subr.mxu0 0.0
    %v1310 = vand.u32 %v564, 4294901760
    %v1311 = vsub.f32 %v564, %v1310
    %v1312 = vand.u32 %v1311, 4294901760
    %1313 = vmatpush1.msra.mxu0 %v1312
    %1314 = vmatprep.subr.mxu0 0.0
    %v1315 = vand.u32 %v565, 4294901760
    %v1316 = vsub.f32 %v565, %v1315
    %v1317 = vand.u32 %v1316, 4294901760
    %1318 = vmatpush1.msra.mxu0 %v1317
    %1319 = vmatprep.subr.mxu0 0.0
    %v1320 = vand.u32 %v566, 4294901760
    %v1321 = vsub.f32 %v566, %v1320
    %v1322 = vand.u32 %v1321, 4294901760
    %1323 = vmatpush1.msra.mxu0 %v1322
    %v1324 = vand.u32 %v534, 4294901760
    %1325 = vmatprep.mubr.f32.mxu0 %v1324
    %v1326 = vand.u32 %v533, 4294901760
    %1327 = vmatmul.mubr.f32.gmra.mrb[0].mxu0 %v1326
    %v1328 = vpop.f32.mrb[0].mxu0
    %v1329 = vadd.f32 %v1161, %v1328
    %v1330 = vpop.f32.mrb[0].mxu0
    %1331 = vdwg.mxu0
    %1332 = vmatprep.subr.mxu0 0.0
    %v1333 = vand.u32 %v535, 4294901760
    %1334 = vmatpush1.msra.mxu0 %v1333
    %1335 = vmatprep.subr.mxu0 0.0
    %v1336 = vand.u32 %v536, 4294901760
    %1337 = vmatpush1.msra.mxu0 %v1336
    %1338 = vmatprep.subr.mxu0 0.0
    %v1339 = vand.u32 %v537, 4294901760
    %1340 = vmatpush1.msra.mxu0 %v1339
    %1341 = vmatprep.subr.mxu0 0.0
    %v1342 = vand.u32 %v538, 4294901760
    %1343 = vmatpush1.msra.mxu0 %v1342
    %1344 = vmatprep.subr.mxu0 0.0
    %v1345 = vand.u32 %v539, 4294901760
    %1346 = vmatpush1.msra.mxu0 %v1345
    %1347 = vmatprep.subr.mxu0 0.0
    %v1348 = vand.u32 %v540, 4294901760
    %1349 = vmatpush1.msra.mxu0 %v1348
    %1350 = vmatprep.subr.mxu0 0.0
    %v1351 = vand.u32 %v541, 4294901760
    %1352 = vmatpush1.msra.mxu0 %v1351
    %1353 = vmatprep.subr.mxu0 0.0
    %v1354 = vand.u32 %v542, 4294901760
    %1355 = vmatpush1.msra.mxu0 %v1354
    %1356 = vmatprep.subr.mxu0 0.0
    %v1357 = vand.u32 %v543, 4294901760
    %1358 = vmatpush1.msra.mxu0 %v1357
    %1359 = vmatprep.subr.mxu0 0.0
    %v1360 = vand.u32 %v544, 4294901760
    %1361 = vmatpush1.msra.mxu0 %v1360
    %1362 = vmatprep.subr.mxu0 0.0
    %v1363 = vand.u32 %v545, 4294901760
    %1364 = vmatpush1.msra.mxu0 %v1363
    %1365 = vmatprep.subr.mxu0 0.0
    %v1366 = vand.u32 %v546, 4294901760
    %1367 = vmatpush1.msra.mxu0 %v1366
    %1368 = vmatprep.subr.mxu0 0.0
    %v1369 = vand.u32 %v547, 4294901760
    %1370 = vmatpush1.msra.mxu0 %v1369
    %1371 = vmatprep.subr.mxu0 0.0
    %v1372 = vand.u32 %v548, 4294901760
    %1373 = vmatpush1.msra.mxu0 %v1372
    %1374 = vmatprep.subr.mxu0 0.0
    %v1375 = vand.u32 %v549, 4294901760
    %1376 = vmatpush1.msra.mxu0 %v1375
    %1377 = vmatprep.subr.mxu0 0.0
    %v1378 = vand.u32 %v550, 4294901760
    %1379 = vmatpush1.msra.mxu0 %v1378
    %1380 = vmatprep.subr.mxu0 0.0
    %v1381 = vand.u32 %v551, 4294901760
    %1382 = vmatpush1.msra.mxu0 %v1381
    %1383 = vmatprep.subr.mxu0 0.0
    %v1384 = vand.u32 %v552, 4294901760
    %1385 = vmatpush1.msra.mxu0 %v1384
    %1386 = vmatprep.subr.mxu0 0.0
    %v1387 = vand.u32 %v553, 4294901760
    %1388 = vmatpush1.msra.mxu0 %v1387
    %1389 = vmatprep.subr.mxu0 0.0
    %v1390 = vand.u32 %v554, 4294901760
    %1391 = vmatpush1.msra.mxu0 %v1390
    %1392 = vmatprep.subr.mxu0 0.0
    %v1393 = vand.u32 %v555, 4294901760
    %1394 = vmatpush1.msra.mxu0 %v1393
    %1395 = vmatprep.subr.mxu0 0.0
    %v1396 = vand.u32 %v556, 4294901760
    %1397 = vmatpush1.msra.mxu0 %v1396
    %1398 = vmatprep.subr.mxu0 0.0
    %v1399 = vand.u32 %v557, 4294901760
    %1400 = vmatpush1.msra.mxu0 %v1399
    %1401 = vmatprep.subr.mxu0 0.0
    %v1402 = vand.u32 %v558, 4294901760
    %1403 = vmatpush1.msra.mxu0 %v1402
    %1404 = vmatprep.subr.mxu0 0.0
    %v1405 = vand.u32 %v559, 4294901760
    %1406 = vmatpush1.msra.mxu0 %v1405
    %1407 = vmatprep.subr.mxu0 0.0
    %v1408 = vand.u32 %v560, 4294901760
    %1409 = vmatpush1.msra.mxu0 %v1408
    %1410 = vmatprep.subr.mxu0 0.0
    %v1411 = vand.u32 %v561, 4294901760
    %1412 = vmatpush1.msra.mxu0 %v1411
    %1413 = vmatprep.subr.mxu0 0.0
    %v1414 = vand.u32 %v562, 4294901760
    %1415 = vmatpush1.msra.mxu0 %v1414
    %1416 = vmatprep.subr.mxu0 0.0
    %v1417 = vand.u32 %v563, 4294901760
    %1418 = vmatpush1.msra.mxu0 %v1417
    %1419 = vmatprep.subr.mxu0 0.0
    %v1420 = vand.u32 %v564, 4294901760
    %1421 = vmatpush1.msra.mxu0 %v1420
    %1422 = vmatprep.subr.mxu0 0.0
    %v1423 = vand.u32 %v565, 4294901760
    %1424 = vmatpush1.msra.mxu0 %v1423
    %1425 = vmatprep.subr.mxu0 0.0
    %v1426 = vand.u32 %v566, 4294901760
    %1427 = vmatpush1.msra.mxu0 %v1426
    %v1428 = vand.u32 %v534, 4294901760
    %1429 = vmatprep.mubr.f32.mxu0 %v1428
    %v1430 = vand.u32 %v533, 4294901760
    %1431 = vmatmul.mubr.f32.gmra.mrb[0].mxu0 %v1430
    %v1432 = vpop.f32.mrb[0].mxu0
    %v1433 = vadd.f32 %v1329, %v1432
    %v1434 = vpop.f32.mrb[0].mxu0
    %1435 = vdwg.mxu0
    %vm1436 = vcmask 64512
    %1437 = vst.msk [vmem:[#allocation2] sm:$0xff] %vm1436, %v1433
    // Predicated region
    $region22: #{tpu_custom_call.1} parent=1 // pred_check
      _
    $region23: #{tpu_custom_call.1} parent=1 // pred_check_branch
      %1439 = sbr.rel (0) target = $region25
    $region24: #{tpu_custom_call.1} parent=1 // pred_region
      %s1441 = ssub.s32 128, 128
      %1442 = vsyncadd [#allocation3], %s1441
      %s1444 = sshll.u32 [#allocation2], 4
      %s1445 = int_to_ptr.vmem [resolvable:$true] %s1444
      %1447 = dma.vmem_to_hbm [thread:$0]  %s1445, 128, %s5, [#allocation3]
    $region25: #{tpu_custom_call.1} parent=1 // pred_fallthru
      _
    // Predicated region
    $region26: #{tpu_custom_call.1} parent=1 // pred_check
      _
    $region27: #{tpu_custom_call.1} parent=1 // pred_check_branch
      %1449 = sbr.rel (0) target = $region29
    $region28: #{tpu_custom_call.1} parent=1 // pred_region
      %1450 = dma.done [#allocation3], 128
    $region29: #{tpu_custom_call.1} parent=1 // pred_fallthru
      _
    %1451 = vsyncpa [#allocation3], 1

</llo_original>
